<compile_context>
chip_gen: v7x
topology: tpu7x:2x2x1
jax: 0.10.0
libtpu: 0.0.40
codegen_flags: <defaults>
</compile_context>

<pallas_src>
import jax
import jax.numpy as jnp
from jax.experimental import pallas as pl
from jax.experimental.pallas import tpu as pltpu

_LANES = 512          # lane width per row (multiple of 128 -> unmasked stores)
_MAX_BLOCK_ROWS = 256 # 256 x 512 x 4B = 512 KiB per input tile (safe on v7x VMEM)


def _sq_err_kernel(pred_ref, target_ref, out_ref):
    # Pure VPU work: diff, square. f32 accumulation regardless of input dtype
    # (v5e has no bf16 VPU path anyway).
    diff = pred_ref[...].astype(jnp.float32) - target_ref[...].astype(jnp.float32)
    out_ref[...] = diff * diff


def mse_loss(pred: jax.Array, target: jax.Array, natoms: jax.Array | None = None) -> jax.Array:
    """Elementwise squared error (nn.MSELoss with reduction='none')."""
    del natoms  # unused, kept for API parity with the PyTorch module
    assert pred.shape == target.shape

    orig_shape = pred.shape
    out_dtype = jnp.result_type(pred.dtype, target.dtype)

    flat_p = pred.reshape(-1)
    flat_t = target.reshape(-1)
    total = flat_p.shape[0]

    # Lane-dense repack: (rows, _LANES), rows rounded up to a multiple of 8
    # sublanes, tiled in chunks of block_rows.
    rows_needed = pl.cdiv(max(total, 1), _LANES)
    rows_needed = ((rows_needed + 7) // 8) * 8
    block_rows = min(_MAX_BLOCK_ROWS, rows_needed)
    n_blocks = pl.cdiv(rows_needed, block_rows)
    padded_rows = n_blocks * block_rows
    padded_total = padded_rows * _LANES

    pad = padded_total - total
    if pad:
        flat_p = jnp.pad(flat_p, (0, pad))
        flat_t = jnp.pad(flat_t, (0, pad))

    p2 = flat_p.reshape(padded_rows, _LANES)
    t2 = flat_t.reshape(padded_rows, _LANES)

    out = pl.pallas_call(
        _sq_err_kernel,
        out_shape=jax.ShapeDtypeStruct((padded_rows, _LANES), jnp.float32),
        grid=(n_blocks,),
        in_specs=[
            pl.BlockSpec((block_rows, _LANES), lambda i: (i, 0)),
            pl.BlockSpec((block_rows, _LANES), lambda i: (i, 0)),
        ],
        out_specs=pl.BlockSpec((block_rows, _LANES), lambda i: (i, 0)),
        compiler_params=pltpu.CompilerParams(
            dimension_semantics=("parallel",),  # independent tiles -> megacore on v7x
        ),
    )(p2, t2)

    out = out.reshape(-1)[:total].reshape(orig_shape)
    return out.astype(out_dtype)


if __name__ == "__main__":
    key = jax.random.PRNGKey(0)
    k1, k2 = jax.random.split(key)

    # Small shapes consistent with the module: N atoms, 3-D force vectors.
    N, D = 16, 3
    pred = jax.random.normal(k1, (N, D), dtype=jnp.float32)
    target = jax.random.normal(k2, (N, D), dtype=jnp.float32)
    natoms = jnp.full((N,), 4, dtype=jnp.int32)  # unused by the forward

    out = mse_loss(pred, target, natoms)
    jax.block_until_ready(out)

    # Reference: elementwise squared error (nn.MSELoss, reduction='none').
    ref = (pred - target) ** 2
    assert out.shape == pred.shape
    assert out.dtype == pred.dtype
    assert jnp.allclose(out, ref, atol=1e-6, rtol=1e-6)

    print("KERNEL_OK")
</pallas_src>

<mosaic_0001>
module attributes {stable_mosaic.version = 11 : i64} {
  func.func @_sq_err_kernel(%arg0: i32, %arg1: memref<8x512xf32, #tpu.memory_space<vmem>>, %arg2: memref<8x512xf32, #tpu.memory_space<vmem>>, %arg3: memref<8x512xf32, #tpu.memory_space<vmem>>) attributes {dimension_semantics = [#tpu.dimension_semantics<parallel>], iteration_bounds = array<i64: 1>, scalar_prefetch = 0 : i64, scratch_operands = 0 : i64, tpu.core_type = #tpu.core_type<tc>, window_params = [{transform_indices = @transform_0, window_bounds = array<i64: 8, 512>}, {transform_indices = @transform_1, window_bounds = array<i64: 8, 512>}, {transform_indices = @transform_2, window_bounds = array<i64: 8, 512>}]} {
    %c0 = arith.constant 0 : index
    %c0_0 = arith.constant 0 : index
    %0 = vector.load %arg1[%c0, %c0_0] : memref<8x512xf32, #tpu.memory_space<vmem>>, vector<8x512xf32>
    %c0_1 = arith.constant 0 : index
    %c0_2 = arith.constant 0 : index
    %1 = vector.load %arg2[%c0_1, %c0_2] : memref<8x512xf32, #tpu.memory_space<vmem>>, vector<8x512xf32>
    %2 = arith.subf %0, %1 : vector<8x512xf32>
    %3 = arith.mulf %2, %2 : vector<8x512xf32>
    %c0_3 = arith.constant 0 : index
    %c0_4 = arith.constant 0 : index
    %4 = vector.load %arg3[%c0_3, %c0_4] : memref<8x512xf32, #tpu.memory_space<vmem>>, vector<8x512xf32>
    tpu.vector_store %arg3[%c0_3, %c0_4], %3 {strides = array<i32>} : memref<8x512xf32, #tpu.memory_space<vmem>>, vector<8x512xf32>,
    return
  }
  func.func @transform_0(%arg0: i32) -> (i32, i32) {
    %c0_i32 = arith.constant 0 : i32
    %c0_i32_0 = arith.constant 0 : i32
    return %arg0, %c0_i32 : i32, i32
  }
  func.func @transform_1(%arg0: i32) -> (i32, i32) {
    %c0_i32 = arith.constant 0 : i32
    %c0_i32_0 = arith.constant 0 : i32
    return %arg0, %c0_i32 : i32, i32
  }
  func.func @transform_2(%arg0: i32) -> (i32, i32) {
    %c0_i32 = arith.constant 0 : i32
    %c0_i32_0 = arith.constant 0 : i32
    return %arg0, %c0_i32 : i32, i32
  }
}

</mosaic_0001>

<llo_original>
// kernel: tpu_custom_call.1
$region0: #{tpu_custom_call.1}
  #allocation0 [shape = 'u32[]', space=smem, size = 0x4, offset = 0x4, fixed_abs, tag = 'smem constant byte address 0x4 - core index']
  #allocation1 [shape = 'u32[144,128]{1,0:T(1,128)}', space=vmem, size = 0x12000, scoped, tag = 'internal scratch']
  %s0 = inlined_call_operand.hbm [shape: f32[8,512], index: 0, kind: input, shape index: {}]
  %s1 = inlined_call_operand.hbm [shape: f32[8,512], index: 1, kind: input, shape index: {}]
  %s2 = inlined_call_operand.hbm [shape: f32[8,512], index: 2, kind: output, shape index: {}]
  %s3 = sld [smem:[#allocation0]]
  $region26: #{tpu_custom_call.1} parent=0
    _
  %s5 = ssub.s32 1, %s3
  %s6 = scalar_select 0, %s5, %s3
  $region1: #{tpu_custom_call.1} parent=0
    #allocation2 [shape = 'u8[16384]{0}', space=vmem, size = 0x4000, scoped, tag = 'input window, operand 0, single buffered']
    #allocation3 [shape = 's32[1]{0}', space=sflag, size = 0x4, scoped, tag = 'scoped memory for tpu_custom_call.1']
    #allocation4 [shape = 's32[1]{0}', space=sflag, size = 0x4, scoped, tag = 'scoped memory for tpu_custom_call.1']
    #allocation5 [shape = 'u8[16384]{0}', space=vmem, size = 0x4000, scoped, tag = 'input window, operand 1, single buffered']
    #allocation6 [shape = 's32[1]{0}', space=sflag, size = 0x4, scoped, tag = 'scoped memory for tpu_custom_call.1']
    #allocation7 [shape = 'u8[16384]{0}', space=vmem, size = 0x4000, scoped, tag = 'output window, operand 0, single buffered']
    %7 = vsyncpa [#allocation3], 0
    %8 = vsyncpa [#allocation6], 0
    %9 = vsyncpa [#allocation4], 0
    // Predicated region
    $region2: #{tpu_custom_call.1} parent=1 // pred_check
      _
    $region3: #{tpu_custom_call.1} parent=1 // pred_check_branch
      %11 = sbr.rel (0) target = $region5
    $region4: #{tpu_custom_call.1} parent=1 // pred_region
      %s13 = ssub.s32 512, 512
      %14 = vsyncadd [#allocation3], %s13
      %s16 = sshll.u32 [#allocation2], 4
      %s17 = int_to_ptr.vmem [resolvable:$true] %s16
      %19 = dma.hbm_to_vmem [thread:$0]  %s0, 512, %s17, [#allocation3]
    $region5: #{tpu_custom_call.1} parent=1 // pred_fallthru
      _
    // Predicated region
    $region6: #{tpu_custom_call.1} parent=1 // pred_check
      _
    $region7: #{tpu_custom_call.1} parent=1 // pred_check_branch
      %21 = sbr.rel (0) target = $region9
    $region8: #{tpu_custom_call.1} parent=1 // pred_region
      %s23 = ssub.s32 512, 512
      %24 = vsyncadd [#allocation6], %s23
      %s26 = sshll.u32 [#allocation5], 4
      %s27 = int_to_ptr.vmem [resolvable:$true] %s26
      %29 = dma.hbm_to_vmem [thread:$0]  %s1, 512, %s27, [#allocation6]
    $region9: #{tpu_custom_call.1} parent=1 // pred_fallthru
      _
    // Predicated region
    $region10: #{tpu_custom_call.1} parent=1 // pred_check
      _
    $region11: #{tpu_custom_call.1} parent=1 // pred_check_branch
      %31 = sbr.rel (0) target = $region13
    $region12: #{tpu_custom_call.1} parent=1 // pred_region
      %32 = dma.done [#allocation3], 512
    $region13: #{tpu_custom_call.1} parent=1 // pred_fallthru
      _
    // Predicated region
    $region14: #{tpu_custom_call.1} parent=1 // pred_check
      _
    $region15: #{tpu_custom_call.1} parent=1 // pred_check_branch
      %34 = sbr.rel (0) target = $region17
    $region16: #{tpu_custom_call.1} parent=1 // pred_region
      %35 = dma.done [#allocation6], 512
    $region17: #{tpu_custom_call.1} parent=1 // pred_fallthru
      _
    %v36 = vld [vmem:[#allocation2] sm:$0xff]
    %v37 = vld [vmem:[#allocation2 + $0x8] sm:$0xff]
    %v38 = vld [vmem:[#allocation2 + $0x10] sm:$0xff]
    %v39 = vld [vmem:[#allocation2 + $0x18] sm:$0xff]
    %v40 = vld [vmem:[#allocation5] sm:$0xff]
    %v41 = vld [vmem:[#allocation5 + $0x8] sm:$0xff]
    %v42 = vld [vmem:[#allocation5 + $0x10] sm:$0xff]
    %v43 = vld [vmem:[#allocation5 + $0x18] sm:$0xff]
    %v44 = vsub.f32 %v36, %v40
    %v45 = vsub.f32 %v37, %v41
    %v46 = vsub.f32 %v38, %v42
    %v47 = vsub.f32 %v39, %v43
    %v48 = vmul.f32 %v44, %v44
    %v49 = vmul.f32 %v45, %v45
    %v50 = vmul.f32 %v46, %v46
    %v51 = vmul.f32 %v47, %v47
    %52 = vst [vmem:[#allocation7] sm:$0xff] %v48
    %53 = vst [vmem:[#allocation7 + $0x8] sm:$0xff] %v49
    %54 = vst [vmem:[#allocation7 + $0x10] sm:$0xff] %v50
    %55 = vst [vmem:[#allocation7 + $0x18] sm:$0xff] %v51
    // Predicated region
    $region18: #{tpu_custom_call.1} parent=1 // pred_check
      _
    $region19: #{tpu_custom_call.1} parent=1 // pred_check_branch
      %57 = sbr.rel (0) target = $region21
    $region20: #{tpu_custom_call.1} parent=1 // pred_region
      %s59 = ssub.s32 512, 512
      %60 = vsyncadd [#allocation4], %s59
      %s62 = sshll.u32 [#allocation7], 4
      %s63 = int_to_ptr.vmem [resolvable:$true] %s62
      %65 = dma.vmem_to_hbm [thread:$0]  %s63, 512, %s2, [#allocation4]
    $region21: #{tpu_custom_call.1} parent=1 // pred_fallthru
      _
    // Predicated region
    $region22: #{tpu_custom_call.1} parent=1 // pred_check
      _
    $region23: #{tpu_custom_call.1} parent=1 // pred_check_branch
      %67 = sbr.rel (0) target = $region25
    $region24: #{tpu_custom_call.1} parent=1 // pred_region
      %68 = dma.done [#allocation4], 512
    $region25: #{tpu_custom_call.1} parent=1 // pred_fallthru
      _
    %69 = vsyncpa [#allocation3], 1
    %70 = vsyncpa [#allocation6], 1
    %71 = vsyncpa [#allocation4], 1

</llo_original>
